<compile_context>
chip_gen: v5e
topology: v5e:2x2
jax: 0.10.0
libtpu: 0.0.40
codegen_flags: <defaults>
</compile_context>

<pallas_src>
import functools

import jax
import jax.numpy as jnp
from jax.experimental import pallas as pl
from jax.experimental.pallas import tpu as pltpu

_NEG_INF = -1e30                     # large-negative (not -inf) keeps the epilogue NaN-free
_VMEM_BUDGET = 40 * 1024 * 1024      # conservative for v7x (64 MiB physical per TC)


def _round_up(x, m):
    return (x + m - 1) // m * m


def _cdiv(a, b):
    return -(-a // b)


def _vmem_bytes(tm, tk, c_pad):
    """Rough double-buffered VMEM footprint of the kernel."""
    x_buf = 2 * tm * tk * 4            # f32 x tiles, double-buffered
    w_buf = 2 * tk * c_pad * 2         # bf16 W tiles, double-buffered
    logits_buf = 2 * tm * c_pad * 4    # f32 logits out, double-buffered
    small = 2 * c_pad * 4 + 4 * tm * 4 # bias + targets + loss blocks
    return x_buf + w_buf + logits_buf + small + (1 << 20)  # +1 MiB slack


def _plan_weights(d, num_classes, tm_plan=256):
    """Choose class padding and K tiling (prefers a fully resident W)."""
    c_pad = _round_up(num_classes, 128)
    if _vmem_bytes(tm_plan, d, c_pad) <= _VMEM_BUDGET:
        return c_pad, d, d                    # tk = D -> W resident, no D padding
    tk = min(2048, _round_up(d, 256))
    while tk > 256 and _vmem_bytes(tm_plan, tk, c_pad) > _VMEM_BUDGET:
        tk //= 2
    tk = max(tk, 256)
    d_pad = _round_up(d, tk)
    return c_pad, tk, d_pad


def _choose_tm(n, tk, c_pad):
    """Pick the M tile: multiple of 16, target 256, >=2 tiles for megacore."""
    n16 = _round_up(max(int(n), 1), 16)
    tm = min(256, n16)
    # v7x has 2 TensorCores; make sure the "parallel" M axis has >= 2 tiles
    # whenever the batch is big enough to split.
    if n16 > 32 and _cdiv(n16, tm) < 2:
        tm = _round_up(_cdiv(n16, 2), 16)
    # Shrink further only if huge class counts blow the VMEM budget.
    while tm > 16 and _vmem_bytes(tm, tk, c_pad) > _VMEM_BUDGET:
        tm = max(16, _round_up(tm // 2, 16))
    return tm


def _vanilla_kernel(x_ref, w_ref, b_ref, t_ref, logits_ref, loss_ref):
    """grid = (M tiles, K tiles); K (reduction) is the last, 'arbitrary' axis.

    The f32 logits output block is resident across K and doubles as the
    matmul accumulator (no separate VMEM scratch).
    """
    k = pl.program_id(1)

    @pl.when(k == 0)
    def _init():
        logits_ref[...] = jnp.zeros_like(logits_ref)

    # x streams from HBM in its original dtype; cast to bf16 on-core for the MXU.
    logits_ref[...] += jnp.dot(x_ref[...].astype(jnp.bfloat16), w_ref[...],
                               preferred_element_type=jnp.float32)

    @pl.when(k == pl.num_programs(1) - 1)
    def _epilogue():
        # Padded class lanes carry a -1e30 bias -> they drop out of the CE.
        logits = logits_ref[...] + b_ref[...]                    # (tm, C_pad) f32
        logits_ref[...] = logits

        # Cross-entropy with integer targets, all in f32.
        mx = jnp.max(logits, axis=-1, keepdims=True)             # (tm, 1)
        z = logits - mx
        lse = jnp.log(jnp.sum(jnp.exp(z), axis=-1, keepdims=True)) + mx

        tgt = t_ref[...]                                         # (tm, 1) int32; -1 = pad row
        onehot = jax.lax.broadcasted_iota(jnp.int32, logits.shape, 1) == tgt
        picked = jnp.sum(jnp.where(onehot, logits, 0.0), axis=-1, keepdims=True)

        # Per-row loss, padded rows contribute exactly 0; wrapper does sum / N.
        loss_ref[...] = jnp.where(tgt >= 0, lse - picked, 0.0)


def prepare_student_params(w, b):
    """One-time (per training run) cast + pad of the student parameters."""
    d, num_classes = w.shape
    c_pad, tk, d_pad = _plan_weights(d, num_classes)
    w_p = jnp.pad(w.astype(jnp.bfloat16),
                  ((0, d_pad - d), (0, c_pad - num_classes)))
    b_p = jnp.pad(b.astype(jnp.float32).reshape(1, num_classes),
                  ((0, 0), (0, c_pad - num_classes)),
                  constant_values=_NEG_INF)
    return {"w": w_p, "b": b_p, "num_classes": num_classes,
            "d": d, "c_pad": c_pad, "tk": tk, "d_pad": d_pad}


@functools.partial(jax.jit, static_argnames=("num_classes", "tm", "tk"))
def _forward_impl(image, target, w_p, b_p, *, num_classes, tm, tk):
    n = image.shape[0]
    d = 1
    for s in image.shape[1:]:
        d *= s
    x = image.reshape(n, d)                                      # NCHW -> (N, D), free reshape
    d_pad, c_pad = w_p.shape
    n_pad = _round_up(n, tm)

    # Pad x only when the batch / K tiling actually requires it (zeros
    # contribute nothing to the dot; padded rows are masked via tgt = -1).
    if (n_pad, d_pad) != (n, d):
        x = jnp.pad(x, ((0, n_pad - n), (0, d_pad - d)))
    t_p = jnp.pad(target.astype(jnp.int32).reshape(n, 1),
                  ((0, n_pad - n), (0, 0)), constant_values=-1)

    grid = (n_pad // tm, d_pad // tk)
    vmem_limit = min(max(int(_vmem_bytes(tm, tk, c_pad) * 1.25) + (2 << 20),
                         32 << 20), 64 << 20)

    logits_p, loss_rows = pl.pallas_call(
        _vanilla_kernel,
        out_shape=(
            jax.ShapeDtypeStruct((n_pad, c_pad), jnp.float32),
            jax.ShapeDtypeStruct((n_pad, 1), jnp.float32),
        ),
        grid_spec=pltpu.PrefetchScalarGridSpec(
            num_scalar_prefetch=0,
            grid=grid,
            in_specs=[
                pl.BlockSpec((tm, tk), lambda m, k: (m, k)),     # x tile (f32 stream)
                pl.BlockSpec((tk, c_pad), lambda m, k: (k, 0)),  # W tile (resident if tk == D)
                pl.BlockSpec((1, c_pad), lambda m, k: (0, 0)),   # bias (resident)
                pl.BlockSpec((tm, 1), lambda m, k: (m, 0)),      # targets (narrow block)
            ],
            out_specs=[
                pl.BlockSpec((tm, c_pad), lambda m, k: (m, 0)),  # logits / accumulator
                pl.BlockSpec((tm, 1), lambda m, k: (m, 0)),      # per-row CE
            ],
        ),
        compiler_params=pltpu.CompilerParams(
            # M tiles independent -> megacore-parallel on v7x; K is the reduction.
            dimension_semantics=("parallel", "arbitrary"),
            vmem_limit_bytes=vmem_limit,
        ),
    )(x, w_p, b_p, t_p)

    logits = logits_p[:n, :num_classes]
    loss = jnp.sum(loss_rows) / n            # padded rows contribute exactly 0
    return logits, loss


def vanilla_forward_train(image, target, prep):
    """Returns (logits_student, {'ce': loss}) like Vanilla.forward_train."""
    tm = _choose_tm(image.shape[0], prep["tk"], prep["c_pad"])
    logits, loss = _forward_impl(image, target, prep["w"], prep["b"],
                                 num_classes=prep["num_classes"],
                                 tm=tm, tk=prep["tk"])
    return logits, {"ce": loss}


def vanilla_forward_test(image, prep):
    """Eval path: just the student logits (loss discarded)."""
    dummy_target = jnp.zeros((image.shape[0],), jnp.int32)
    logits, _ = vanilla_forward_train(image, dummy_target, prep)
    return logits


if __name__ == "__main__":
    # Small deterministic example consistent with an NCHW image classifier.
    N, C, H, W = 2, 4, 16, 16
    D = C * H * W            # 1024
    NUM_CLASSES = 10

    key = jax.random.PRNGKey(0)
    k_img, k_w, k_b, k_t = jax.random.split(key, 4)

    image = jax.random.normal(k_img, (N, C, H, W), jnp.float32)
    target = jax.random.randint(k_t, (N,), 0, NUM_CLASSES, jnp.int32)

    # Deterministic student params (PyTorch nn.Linear-style uniform init).
    bound = 1.0 / jnp.sqrt(D)
    w = jax.random.uniform(k_w, (D, NUM_CLASSES), jnp.float32, -bound, bound)
    b = jax.random.uniform(k_b, (NUM_CLASSES,), jnp.float32, -bound, bound)

    prep = prepare_student_params(w, b)      # hoisted once, reused every step

    def ref_forward(img, tgt):
        x_flat = img.reshape(img.shape[0], -1)
        xb = x_flat.astype(jnp.bfloat16).astype(jnp.float32)
        wb = w.astype(jnp.bfloat16).astype(jnp.float32)
        ref_logits = xb @ wb + b
        ref_lse = jax.scipy.special.logsumexp(ref_logits, axis=-1)
        ref_ce = jnp.mean(ref_lse - ref_logits[jnp.arange(img.shape[0]), tgt])
        return ref_logits, ref_ce

    # --- small batch (single M tile, W resident) ---
    logits, losses = vanilla_forward_train(image, target, prep)
    logits = jax.block_until_ready(logits)
    ce = jax.block_until_ready(losses["ce"])

    ref_logits, ref_ce = ref_forward(image, target)
    assert logits.shape == (N, NUM_CLASSES)
    assert jnp.allclose(logits, ref_logits, atol=2e-3, rtol=2e-3), "logits mismatch"
    assert jnp.allclose(ce, ref_ce, atol=2e-3, rtol=2e-3), "ce loss mismatch"

    # --- larger ragged batch (multiple M tiles, row padding, megacore split) ---
    N2 = 40
    k_img2, k_t2 = jax.random.split(jax.random.PRNGKey(1), 2)
    image2 = jax.random.normal(k_img2, (N2, C, H, W), jnp.float32)
    target2 = jax.random.randint(k_t2, (N2,), 0, NUM_CLASSES, jnp.int32)

    logits2, losses2 = vanilla_forward_train(image2, target2, prep)
    logits2 = jax.block_until_ready(logits2)
    ce2 = jax.block_until_ready(losses2["ce"])

    ref_logits2, ref_ce2 = ref_forward(image2, target2)
    assert logits2.shape == (N2, NUM_CLASSES)
    assert jnp.allclose(logits2, ref_logits2, atol=2e-3, rtol=2e-3), "logits mismatch (batch 40)"
    assert jnp.allclose(ce2, ref_ce2, atol=2e-3, rtol=2e-3), "ce loss mismatch (batch 40)"

    # Eval path (forward_test).
    _ = jax.block_until_ready(vanilla_forward_test(image, prep))

    print("KERNEL_OK")
</pallas_src>

<mosaic_0001>
module attributes {stable_mosaic.version = 11 : i64} {
  func.func @_vanilla_kernel(%arg0: i32, %arg1: i32, %arg2: memref<16x1024xf32, #tpu.memory_space<vmem>>, %arg3: memref<1024x128xbf16, #tpu.memory_space<vmem>>, %arg4: memref<1x128xf32, #tpu.memory_space<vmem>>, %arg5: memref<16x1xi32, #tpu.memory_space<vmem>>, %arg6: memref<16x128xf32, #tpu.memory_space<vmem>>, %arg7: memref<16x1xf32, #tpu.memory_space<vmem>>) attributes {dimension_semantics = [#tpu.dimension_semantics<parallel>, #tpu.dimension_semantics<arbitrary>], iteration_bounds = array<i64: 1, 1>, scalar_prefetch = 0 : i64, scratch_operands = 0 : i64, tpu.core_type = #tpu.core_type<tc>, window_params = [{transform_indices = @transform_0, window_bounds = array<i64: 16, 1024>}, {transform_indices = @transform_1, window_bounds = array<i64: 1024, 128>}, {pipeline_mode = #tpu.pipeline_mode<synchronous>, transform_indices = @transform_2, window_bounds = array<i64: 1, 128>}, {transform_indices = @transform_3, window_bounds = array<i64: 16, 1>}, {transform_indices = @transform_4, window_bounds = array<i64: 16, 128>}, {transform_indices = @transform_5, window_bounds = array<i64: 16, 1>}]} {
    %c0_i32 = arith.constant 0 : i32
    %0 = arith.cmpi eq, %arg1, %c0_i32 : i32
    %1 = arith.extui %0 : i1 to i32
    %c0_i32_0 = arith.constant 0 : i32
    %2 = arith.cmpi ne, %1, %c0_i32_0 : i32
    scf.if %2 {
      %cst_10 = arith.constant 0.000000e+00 : f32
      %13 = vector.broadcast %cst_10 : f32 to vector<16x128xf32>
      %c0_11 = arith.constant 0 : index
      %c0_12 = arith.constant 0 : index
      %14 = vector.load %arg6[%c0_11, %c0_12] : memref<16x128xf32, #tpu.memory_space<vmem>>, vector<16x128xf32>
      tpu.vector_store %arg6[%c0_11, %c0_12], %13 {strides = array<i32>} : memref<16x128xf32, #tpu.memory_space<vmem>>, vector<16x128xf32>,
    } else {
    }
    %c0 = arith.constant 0 : index
    %c0_1 = arith.constant 0 : index
    %3 = vector.load %arg6[%c0, %c0_1] : memref<16x128xf32, #tpu.memory_space<vmem>>, vector<16x128xf32>
    %c0_2 = arith.constant 0 : index
    %c0_3 = arith.constant 0 : index
    %4 = vector.load %arg2[%c0_2, %c0_3] : memref<16x1024xf32, #tpu.memory_space<vmem>>, vector<16x1024xf32>
    %5 = arith.truncf %4 : vector<16x1024xf32> to vector<16x1024xbf16>
    %c0_4 = arith.constant 0 : index
    %c0_5 = arith.constant 0 : index
    %6 = vector.load %arg3[%c0_4, %c0_5] : memref<1024x128xbf16, #tpu.memory_space<vmem>>, vector<1024x128xbf16>
    %cst = arith.constant dense<0.000000e+00> : vector<16x128xf32>
    %7 = tpu.matmul %5, %6, %cst {dimension_numbers = #tpu.dot_dimension_numbers<[1], [0], [0], [1], [0, 0, 1, 1], [], []>} : vector<16x1024xbf16>, vector<1024x128xbf16>, vector<16x128xf32> -> vector<16x128xf32>
    %8 = arith.addf %3, %7 : vector<16x128xf32>
    %c0_6 = arith.constant 0 : index
    %c0_7 = arith.constant 0 : index
    %9 = vector.load %arg6[%c0_6, %c0_7] : memref<16x128xf32, #tpu.memory_space<vmem>>, vector<16x128xf32>
    tpu.vector_store %arg6[%c0_6, %c0_7], %8 {strides = array<i32>} : memref<16x128xf32, #tpu.memory_space<vmem>>, vector<16x128xf32>,
    %c0_i32_8 = arith.constant 0 : i32
    %10 = arith.cmpi eq, %arg1, %c0_i32_8 : i32
    %11 = arith.extui %10 : i1 to i32
    %c0_i32_9 = arith.constant 0 : i32
    %12 = arith.cmpi ne, %11, %c0_i32_9 : i32
    scf.if %12 {
      %c0_10 = arith.constant 0 : index
      %c0_11 = arith.constant 0 : index
      %13 = vector.load %arg6[%c0_10, %c0_11] : memref<16x128xf32, #tpu.memory_space<vmem>>, vector<16x128xf32>
      %c0_12 = arith.constant 0 : index
      %c0_13 = arith.constant 0 : index
      %14 = vector.load %arg4[%c0_12, %c0_13] : memref<1x128xf32, #tpu.memory_space<vmem>>, vector<1x128xf32>
      %15 = vector.broadcast %14 : vector<1x128xf32> to vector<16x128xf32>
      %16 = arith.addf %13, %15 : vector<16x128xf32>
      %c0_14 = arith.constant 0 : index
      %c0_15 = arith.constant 0 : index
      %17 = vector.load %arg6[%c0_14, %c0_15] : memref<16x128xf32, #tpu.memory_space<vmem>>, vector<16x128xf32>
      tpu.vector_store %arg6[%c0_14, %c0_15], %16 {strides = array<i32>} : memref<16x128xf32, #tpu.memory_space<vmem>>, vector<16x128xf32>,
      %cst_16 = arith.constant dense<0xFF800000> : vector<16xf32>
      %18 = vector.multi_reduction <maximumf>, %16, %cst_16 [1] : vector<16x128xf32> to vector<16xf32>
      %19 = vector.shape_cast %18 : vector<16xf32> to vector<16x1xf32>
      %20 = vector.broadcast %19 : vector<16x1xf32> to vector<16x128xf32>
      %21 = arith.subf %16, %20 : vector<16x128xf32>
      %22 = math.exp %21 : vector<16x128xf32>
      %cst_17 = arith.constant dense<0.000000e+00> : vector<16xf32>
      %23 = vector.multi_reduction <add>, %22, %cst_17 [1] : vector<16x128xf32> to vector<16xf32>
      %24 = vector.shape_cast %23 : vector<16xf32> to vector<16x1xf32>
      %25 = math.log %24 : vector<16x1xf32>
      %26 = arith.addf %25, %19 : vector<16x1xf32>
      %c0_18 = arith.constant 0 : index
      %c0_19 = arith.constant 0 : index
      %27 = vector.load %arg5[%c0_18, %c0_19] : memref<16x1xi32, #tpu.memory_space<vmem>>, vector<16x1xi32>
      %28 = tpu.iota {dimensions = array<i32: 1>} : vector<16x128xi32>
      %29 = vector.broadcast %27 : vector<16x1xi32> to vector<16x128xi32>
      %30 = arith.cmpi eq, %28, %29 : vector<16x128xi32>
      %cst_20 = arith.constant 0.000000e+00 : f32
      %31 = vector.broadcast %cst_20 : f32 to vector<16x128xf32>
      %32 = arith.select %30, %16, %31 : vector<16x128xi1>, vector<16x128xf32>
      %cst_21 = arith.constant dense<0.000000e+00> : vector<16xf32>
      %33 = vector.multi_reduction <add>, %32, %cst_21 [1] : vector<16x128xf32> to vector<16xf32>
      %34 = vector.shape_cast %33 : vector<16xf32> to vector<16x1xf32>
      %c0_i32_22 = arith.constant 0 : i32
      %35 = vector.broadcast %c0_i32_22 : i32 to vector<16x1xi32>
      %36 = arith.cmpi sge, %27, %35 : vector<16x1xi32>
      %37 = arith.subf %26, %34 : vector<16x1xf32>
      %cst_23 = arith.constant 0.000000e+00 : f32
      %38 = vector.broadcast %cst_23 : f32 to vector<16x1xf32>
      %39 = arith.select %36, %37, %38 : vector<16x1xi1>, vector<16x1xf32>
      %c0_24 = arith.constant 0 : index
      %c0_25 = arith.constant 0 : index
      %40 = vector.load %arg7[%c0_24, %c0_25] : memref<16x1xf32, #tpu.memory_space<vmem>>, vector<16x1xf32>
      tpu.vector_store %arg7[%c0_24, %c0_25], %39 {strides = array<i32>} : memref<16x1xf32, #tpu.memory_space<vmem>>, vector<16x1xf32>,
    } else {
    }
    return
  }
  func.func @transform_0(%arg0: i32, %arg1: i32) -> (i32, i32) {
    %c0_i32 = arith.constant 0 : i32
    return %arg0, %arg1 : i32, i32
  }
  func.func @transform_1(%arg0: i32, %arg1: i32) -> (i32, i32) {
    %c0_i32 = arith.constant 0 : i32
    %c0_i32_0 = arith.constant 0 : i32
    return %arg1, %c0_i32 : i32, i32
  }
  func.func @transform_2(%arg0: i32, %arg1: i32) -> (i32, i32) {
    %c0_i32 = arith.constant 0 : i32
    %c0_i32_0 = arith.constant 0 : i32
    %c0_i32_1 = arith.constant 0 : i32
    return %c0_i32, %c0_i32_0 : i32, i32
  }
  func.func @transform_3(%arg0: i32, %arg1: i32) -> (i32, i32) {
    %c0_i32 = arith.constant 0 : i32
    %c0_i32_0 = arith.constant 0 : i32
    return %arg0, %c0_i32 : i32, i32
  }
  func.func @transform_4(%arg0: i32, %arg1: i32) -> (i32, i32) {
    %c0_i32 = arith.constant 0 : i32
    %c0_i32_0 = arith.constant 0 : i32
    return %arg0, %c0_i32 : i32, i32
  }
  func.func @transform_5(%arg0: i32, %arg1: i32) -> (i32, i32) {
    %c0_i32 = arith.constant 0 : i32
    %c0_i32_0 = arith.constant 0 : i32
    return %arg0, %c0_i32 : i32, i32
  }
}

</mosaic_0001>

<llo_original>
// kernel: _forward_impl.1
$region0: #{_forward_impl.1}
  #allocation0 [shape = 'u32[]', space=smem, size = 0x4, offset = 0x4, fixed_abs, tag = 'smem constant byte address 0x4 - core index']
  #allocation1 [shape = 'u32[72,128]{1,0:T(1,128)}', space=vmem, size = 0x9000, scoped, tag = 'internal scratch']
  %s0 = inlined_call_operand.vmem [shape: f32[16,1024], index: 0, kind: input, shape index: {}]
  %s1 = inlined_call_operand.hbm [shape: bf16[1024,128], index: 1, kind: input, shape index: {}]
  %s2 = inlined_call_operand.vmem [shape: f32[1,128], index: 2, kind: input, shape index: {}]
  %s3 = inlined_call_operand.vmem [shape: s32[16,1], index: 3, kind: input, shape index: {}]
  %s4 = inlined_call_operand.vmem [shape: f32[16,128], index: 4, kind: output, shape index: {0}]
  %s5 = inlined_call_operand.vmem [shape: f32[16,1], index: 5, kind: output, shape index: {1}]
  %6 = xla_tuple %s4, %s5
  %s7 = sld [smem:[#allocation0]]
  $region46: #{_forward_impl.1} parent=0
    _
  %s9 = ssub.s32 1, %s7
  %s10 = scalar_select 0, %s9, %s7
  $region1: #{_forward_impl.1} parent=0
    #allocation2 [shape = 'u8[262144]{0}', space=vmem, size = 0x40000, scoped, tag = 'input window, operand 1, single buffered']
    #allocation3 [shape = 's32[1]{0}', space=sflag, size = 0x4, scoped, tag = 'scoped memory for _forward_impl.1']
    %11 = vsyncpa [#allocation3], 0
    // Predicated region
    $region2: #{_forward_impl.1} parent=1 // pred_check
      _
    $region3: #{_forward_impl.1} parent=1 // pred_check_branch
      %13 = sbr.rel (0) target = $region5
    $region4: #{_forward_impl.1} parent=1 // pred_region
      _
    $region5: #{_forward_impl.1} parent=1 // pred_fallthru
      _
    // Predicated region
    $region6: #{_forward_impl.1} parent=1 // pred_check
      _
    $region7: #{_forward_impl.1} parent=1 // pred_check_branch
      %15 = sbr.rel (0) target = $region9
    $region8: #{_forward_impl.1} parent=1 // pred_region
      %17 = vsyncadd [#allocation3], 0
      %s18 = sshll.u32 %s1, 4
      %s19 = int_to_ptr.hbm [resolvable:$true] %s18
      %s20 = sshll.u32 [#allocation2], 4
      %s21 = int_to_ptr.vmem [resolvable:$true] %s20
      %26 = dma.hbm_to_vmem [thread:$0]  %s19, 8192, %s21, [#allocation3], 64, 64, 4
    $region9: #{_forward_impl.1} parent=1 // pred_fallthru
      _
    // Predicated region
    $region10: #{_forward_impl.1} parent=1 // pred_check
      _
    $region11: #{_forward_impl.1} parent=1 // pred_check_branch
      %28 = sbr.rel (0) target = $region13
    $region12: #{_forward_impl.1} parent=1 // pred_region
      _
    $region13: #{_forward_impl.1} parent=1 // pred_fallthru
      _
    // Predicated region
    $region14: #{_forward_impl.1} parent=1 // pred_check
      _
    $region15: #{_forward_impl.1} parent=1 // pred_check_branch
      %30 = sbr.rel (0) target = $region17
    $region16: #{_forward_impl.1} parent=1 // pred_region
      _
    $region17: #{_forward_impl.1} parent=1 // pred_fallthru
      _
    // Predicated region
    $region18: #{_forward_impl.1} parent=1 // pred_check
      _
    $region19: #{_forward_impl.1} parent=1 // pred_check_branch
      %32 = sbr.rel (0) target = $region21
    $region20: #{_forward_impl.1} parent=1 // pred_region
      %34 = dma.done [#allocation3], 8192
    $region21: #{_forward_impl.1} parent=1 // pred_fallthru
      _
    %p35 = scmp.eq.s32.totalorder 0, 0
    // Predicated region
    $region22: #{_forward_impl.1} parent=1 // pred_check
      %p36 = pneg %p35
    $region23: #{_forward_impl.1} parent=1 // pred_check_branch
      %38 = sbr.rel (%p36) target = $region25
    $region24: #{_forward_impl.1} parent=1 // pred_region
      %39 = vst [vmem:[%s4] sm:$0xff] 0.0
      %40 = vst [vmem:[%s4 + $0x8] sm:$0xff] 0.0
    $region25: #{_forward_impl.1} parent=1 // pred_fallthru
      _
    %v41 = vld [vmem:[%s4] sm:$0xff]
    %v42 = vld [vmem:[%s4 + $0x8] sm:$0xff]
    %v43 = vld [vmem:[%s0] sm:$0xff]
    %v44 = vld [vmem:[%s0 + $0x8] sm:$0xff]
    %v45 = vld [vmem:[%s0 + $0x10] sm:$0xff]
    %v46 = vld [vmem:[%s0 + $0x18] sm:$0xff]
    %v47 = vld [vmem:[%s0 + $0x20] sm:$0xff]
    %v48 = vld [vmem:[%s0 + $0x28] sm:$0xff]
    %v49 = vld [vmem:[%s0 + $0x30] sm:$0xff]
    %v50 = vld [vmem:[%s0 + $0x38] sm:$0xff]
    %v51 = vld [vmem:[%s0 + $0x40] sm:$0xff]
    %v52 = vld [vmem:[%s0 + $0x48] sm:$0xff]
    %v53 = vld [vmem:[%s0 + $0x50] sm:$0xff]
    %v54 = vld [vmem:[%s0 + $0x58] sm:$0xff]
    %v55 = vld [vmem:[%s0 + $0x60] sm:$0xff]
    %v56 = vld [vmem:[%s0 + $0x68] sm:$0xff]
    %v57 = vld [vmem:[%s0 + $0x70] sm:$0xff]
    %v58 = vld [vmem:[%s0 + $0x78] sm:$0xff]
    %v59 = vpack.c.bf16 %v51, %v43
    %v60 = vpack.c.bf16 %v52, %v44
    %v61 = vpack.c.bf16 %v53, %v45
    %v62 = vpack.c.bf16 %v54, %v46
    %v63 = vpack.c.bf16 %v55, %v47
    %v64 = vpack.c.bf16 %v56, %v48
    %v65 = vpack.c.bf16 %v57, %v49
    %v66 = vpack.c.bf16 %v58, %v50
    %v67 = vld [vmem:[#allocation2] sm:$0xf]
    %v68 = vld [vmem:[#allocation2 + $0x4] sm:$0xf]
    %v69 = vld [vmem:[#allocation2 + $0x8] sm:$0xf]
    %v70 = vld [vmem:[#allocation2 + $0xc] sm:$0xf]
    %v71 = vld [vmem:[#allocation2 + $0x10] sm:$0xf]
    %v72 = vld [vmem:[#allocation2 + $0x14] sm:$0xf]
    %v73 = vld [vmem:[#allocation2 + $0x18] sm:$0xf]
    %v74 = vld [vmem:[#allocation2 + $0x1c] sm:$0xf]
    %v75 = vld [vmem:[#allocation2 + $0x20] sm:$0xf]
    %v76 = vld [vmem:[#allocation2 + $0x24] sm:$0xf]
    %v77 = vld [vmem:[#allocation2 + $0x28] sm:$0xf]
    %v78 = vld [vmem:[#allocation2 + $0x2c] sm:$0xf]
    %v79 = vld [vmem:[#allocation2 + $0x30] sm:$0xf]
    %v80 = vld [vmem:[#allocation2 + $0x34] sm:$0xf]
    %v81 = vld [vmem:[#allocation2 + $0x38] sm:$0xf]
    %v82 = vld [vmem:[#allocation2 + $0x3c] sm:$0xf]
    %v83 = vld [vmem:[#allocation2 + $0x40] sm:$0xf]
    %v84 = vld [vmem:[#allocation2 + $0x44] sm:$0xf]
    %v85 = vld [vmem:[#allocation2 + $0x48] sm:$0xf]
    %v86 = vld [vmem:[#allocation2 + $0x4c] sm:$0xf]
    %v87 = vld [vmem:[#allocation2 + $0x50] sm:$0xf]
    %v88 = vld [vmem:[#allocation2 + $0x54] sm:$0xf]
    %v89 = vld [vmem:[#allocation2 + $0x58] sm:$0xf]
    %v90 = vld [vmem:[#allocation2 + $0x5c] sm:$0xf]
    %v91 = vld [vmem:[#allocation2 + $0x60] sm:$0xf]
    %v92 = vld [vmem:[#allocation2 + $0x64] sm:$0xf]
    %v93 = vld [vmem:[#allocation2 + $0x68] sm:$0xf]
    %v94 = vld [vmem:[#allocation2 + $0x6c] sm:$0xf]
    %v95 = vld [vmem:[#allocation2 + $0x70] sm:$0xf]
    %v96 = vld [vmem:[#allocation2 + $0x74] sm:$0xf]
    %v97 = vld [vmem:[#allocation2 + $0x78] sm:$0xf]
    %v98 = vld [vmem:[#allocation2 + $0x7c] sm:$0xf]
    %v99 = vld [vmem:[#allocation2 + $0x80] sm:$0xf]
    %v100 = vld [vmem:[#allocation2 + $0x84] sm:$0xf]
    %v101 = vld [vmem:[#allocation2 + $0x88] sm:$0xf]
    %v102 = vld [vmem:[#allocation2 + $0x8c] sm:$0xf]
    %v103 = vld [vmem:[#allocation2 + $0x90] sm:$0xf]
    %v104 = vld [vmem:[#allocation2 + $0x94] sm:$0xf]
    %v105 = vld [vmem:[#allocation2 + $0x98] sm:$0xf]
    %v106 = vld [vmem:[#allocation2 + $0x9c] sm:$0xf]
    %v107 = vld [vmem:[#allocation2 + $0xa0] sm:$0xf]
    %v108 = vld [vmem:[#allocation2 + $0xa4] sm:$0xf]
    %v109 = vld [vmem:[#allocation2 + $0xa8] sm:$0xf]
    %v110 = vld [vmem:[#allocation2 + $0xac] sm:$0xf]
    %v111 = vld [vmem:[#allocation2 + $0xb0] sm:$0xf]
    %v112 = vld [vmem:[#allocation2 + $0xb4] sm:$0xf]
    %v113 = vld [vmem:[#allocation2 + $0xb8] sm:$0xf]
    %v114 = vld [vmem:[#allocation2 + $0xbc] sm:$0xf]
    %v115 = vld [vmem:[#allocation2 + $0xc0] sm:$0xf]
    %v116 = vld [vmem:[#allocation2 + $0xc4] sm:$0xf]
    %v117 = vld [vmem:[#allocation2 + $0xc8] sm:$0xf]
    %v118 = vld [vmem:[#allocation2 + $0xcc] sm:$0xf]
    %v119 = vld [vmem:[#allocation2 + $0xd0] sm:$0xf]
    %v120 = vld [vmem:[#allocation2 + $0xd4] sm:$0xf]
    %v121 = vld [vmem:[#allocation2 + $0xd8] sm:$0xf]
    %v122 = vld [vmem:[#allocation2 + $0xdc] sm:$0xf]
    %v123 = vld [vmem:[#allocation2 + $0xe0] sm:$0xf]
    %v124 = vld [vmem:[#allocation2 + $0xe4] sm:$0xf]
    %v125 = vld [vmem:[#allocation2 + $0xe8] sm:$0xf]
    %v126 = vld [vmem:[#allocation2 + $0xec] sm:$0xf]
    %v127 = vld [vmem:[#allocation2 + $0xf0] sm:$0xf]
    %v128 = vld [vmem:[#allocation2 + $0xf4] sm:$0xf]
    %v129 = vld [vmem:[#allocation2 + $0xf8] sm:$0xf]
    %v130 = vld [vmem:[#allocation2 + $0xfc] sm:$0xf]
    %v131 = vld [vmem:[#allocation2 + $0x100] sm:$0xf]
    %v132 = vld [vmem:[#allocation2 + $0x104] sm:$0xf]
    %v133 = vld [vmem:[#allocation2 + $0x108] sm:$0xf]
    %v134 = vld [vmem:[#allocation2 + $0x10c] sm:$0xf]
    %v135 = vld [vmem:[#allocation2 + $0x110] sm:$0xf]
    %v136 = vld [vmem:[#allocation2 + $0x114] sm:$0xf]
    %v137 = vld [vmem:[#allocation2 + $0x118] sm:$0xf]
    %v138 = vld [vmem:[#allocation2 + $0x11c] sm:$0xf]
    %v139 = vld [vmem:[#allocation2 + $0x120] sm:$0xf]
    %v140 = vld [vmem:[#allocation2 + $0x124] sm:$0xf]
    %v141 = vld [vmem:[#allocation2 + $0x128] sm:$0xf]
    %v142 = vld [vmem:[#allocation2 + $0x12c] sm:$0xf]
    %v143 = vld [vmem:[#allocation2 + $0x130] sm:$0xf]
    %v144 = vld [vmem:[#allocation2 + $0x134] sm:$0xf]
    %v145 = vld [vmem:[#allocation2 + $0x138] sm:$0xf]
    %v146 = vld [vmem:[#allocation2 + $0x13c] sm:$0xf]
    %v147 = vld [vmem:[#allocation2 + $0x140] sm:$0xf]
    %v148 = vld [vmem:[#allocation2 + $0x144] sm:$0xf]
    %v149 = vld [vmem:[#allocation2 + $0x148] sm:$0xf]
    %v150 = vld [vmem:[#allocation2 + $0x14c] sm:$0xf]
    %v151 = vld [vmem:[#allocation2 + $0x150] sm:$0xf]
    %v152 = vld [vmem:[#allocation2 + $0x154] sm:$0xf]
    %v153 = vld [vmem:[#allocation2 + $0x158] sm:$0xf]
    %v154 = vld [vmem:[#allocation2 + $0x15c] sm:$0xf]
    %v155 = vld [vmem:[#allocation2 + $0x160] sm:$0xf]
    %v156 = vld [vmem:[#allocation2 + $0x164] sm:$0xf]
    %v157 = vld [vmem:[#allocation2 + $0x168] sm:$0xf]
    %v158 = vld [vmem:[#allocation2 + $0x16c] sm:$0xf]
    %v159 = vld [vmem:[#allocation2 + $0x170] sm:$0xf]
    %v160 = vld [vmem:[#allocation2 + $0x174] sm:$0xf]
    %v161 = vld [vmem:[#allocation2 + $0x178] sm:$0xf]
    %v162 = vld [vmem:[#allocation2 + $0x17c] sm:$0xf]
    %v163 = vld [vmem:[#allocation2 + $0x180] sm:$0xf]
    %v164 = vld [vmem:[#allocation2 + $0x184] sm:$0xf]
    %v165 = vld [vmem:[#allocation2 + $0x188] sm:$0xf]
    %v166 = vld [vmem:[#allocation2 + $0x18c] sm:$0xf]
    %v167 = vld [vmem:[#allocation2 + $0x190] sm:$0xf]
    %v168 = vld [vmem:[#allocation2 + $0x194] sm:$0xf]
    %v169 = vld [vmem:[#allocation2 + $0x198] sm:$0xf]
    %v170 = vld [vmem:[#allocation2 + $0x19c] sm:$0xf]
    %v171 = vld [vmem:[#allocation2 + $0x1a0] sm:$0xf]
    %v172 = vld [vmem:[#allocation2 + $0x1a4] sm:$0xf]
    %v173 = vld [vmem:[#allocation2 + $0x1a8] sm:$0xf]
    %v174 = vld [vmem:[#allocation2 + $0x1ac] sm:$0xf]
    %v175 = vld [vmem:[#allocation2 + $0x1b0] sm:$0xf]
    %v176 = vld [vmem:[#allocation2 + $0x1b4] sm:$0xf]
    %v177 = vld [vmem:[#allocation2 + $0x1b8] sm:$0xf]
    %v178 = vld [vmem:[#allocation2 + $0x1bc] sm:$0xf]
    %v179 = vld [vmem:[#allocation2 + $0x1c0] sm:$0xf]
    %v180 = vld [vmem:[#allocation2 + $0x1c4] sm:$0xf]
    %v181 = vld [vmem:[#allocation2 + $0x1c8] sm:$0xf]
    %v182 = vld [vmem:[#allocation2 + $0x1cc] sm:$0xf]
    %v183 = vld [vmem:[#allocation2 + $0x1d0] sm:$0xf]
    %v184 = vld [vmem:[#allocation2 + $0x1d4] sm:$0xf]
    %v185 = vld [vmem:[#allocation2 + $0x1d8] sm:$0xf]
    %v186 = vld [vmem:[#allocation2 + $0x1dc] sm:$0xf]
    %v187 = vld [vmem:[#allocation2 + $0x1e0] sm:$0xf]
    %v188 = vld [vmem:[#allocation2 + $0x1e4] sm:$0xf]
    %v189 = vld [vmem:[#allocation2 + $0x1e8] sm:$0xf]
    %v190 = vld [vmem:[#allocation2 + $0x1ec] sm:$0xf]
    %v191 = vld [vmem:[#allocation2 + $0x1f0] sm:$0xf]
    %v192 = vld [vmem:[#allocation2 + $0x1f4] sm:$0xf]
    %v193 = vld [vmem:[#allocation2 + $0x1f8] sm:$0xf]
    %v194 = vld [vmem:[#allocation2 + $0x1fc] sm:$0xf]
    %v323 = vunpack.c.l.b16 %v67
    %v324 = vunpack.c.l.b16 %v68
    %v325 = vunpack.c.l.b16 %v69
    %v326 = vunpack.c.l.b16 %v70
    %v327 = vunpack.c.l.b16 %v71
    %v328 = vunpack.c.l.b16 %v72
    %v329 = vunpack.c.l.b16 %v73
    %v330 = vunpack.c.l.b16 %v74
    %v331 = vunpack.c.l.b16 %v75
    %v332 = vunpack.c.l.b16 %v76
    %v333 = vunpack.c.l.b16 %v77
    %v334 = vunpack.c.l.b16 %v78
    %v335 = vunpack.c.l.b16 %v79
    %v336 = vunpack.c.l.b16 %v80
    %v337 = vunpack.c.l.b16 %v81
    %v338 = vunpack.c.l.b16 %v82
    %v339 = vunpack.c.l.b16 %v83
    %v340 = vunpack.c.l.b16 %v84
    %v341 = vunpack.c.l.b16 %v85
    %v342 = vunpack.c.l.b16 %v86
    %v343 = vunpack.c.l.b16 %v87
    %v344 = vunpack.c.l.b16 %v88
    %v345 = vunpack.c.l.b16 %v89
    %v346 = vunpack.c.l.b16 %v90
    %v347 = vunpack.c.l.b16 %v91
    %v348 = vunpack.c.l.b16 %v92
    %v349 = vunpack.c.l.b16 %v93
    %v350 = vunpack.c.l.b16 %v94
    %v351 = vunpack.c.l.b16 %v95
    %v352 = vunpack.c.l.b16 %v96
    %v353 = vunpack.c.l.b16 %v97
    %v354 = vunpack.c.l.b16 %v98
    %v355 = vunpack.c.l.b16 %v99
    %v356 = vunpack.c.l.b16 %v100
    %v357 = vunpack.c.l.b16 %v101
    %v358 = vunpack.c.l.b16 %v102
    %v359 = vunpack.c.l.b16 %v103
    %v360 = vunpack.c.l.b16 %v104
    %v361 = vunpack.c.l.b16 %v105
    %v362 = vunpack.c.l.b16 %v106
    %v363 = vunpack.c.l.b16 %v107
    %v364 = vunpack.c.l.b16 %v108
    %v365 = vunpack.c.l.b16 %v109
    %v366 = vunpack.c.l.b16 %v110
    %v367 = vunpack.c.l.b16 %v111
    %v368 = vunpack.c.l.b16 %v112
    %v369 = vunpack.c.l.b16 %v113
    %v370 = vunpack.c.l.b16 %v114
    %v371 = vunpack.c.l.b16 %v115
    %v372 = vunpack.c.l.b16 %v116
    %v373 = vunpack.c.l.b16 %v117
    %v374 = vunpack.c.l.b16 %v118
    %v375 = vunpack.c.l.b16 %v119
    %v376 = vunpack.c.l.b16 %v120
    %v377 = vunpack.c.l.b16 %v121
    %v378 = vunpack.c.l.b16 %v122
    %v379 = vunpack.c.l.b16 %v123
    %v380 = vunpack.c.l.b16 %v124
    %v381 = vunpack.c.l.b16 %v125
    %v382 = vunpack.c.l.b16 %v126
    %v383 = vunpack.c.l.b16 %v127
    %v384 = vunpack.c.l.b16 %v128
    %v385 = vunpack.c.l.b16 %v129
    %v386 = vunpack.c.l.b16 %v130
    %v387 = vunpack.c.l.b16 %v131
    %v388 = vunpack.c.l.b16 %v132
    %v389 = vunpack.c.l.b16 %v133
    %v390 = vunpack.c.l.b16 %v134
    %v391 = vunpack.c.l.b16 %v135
    %v392 = vunpack.c.l.b16 %v136
    %v393 = vunpack.c.l.b16 %v137
    %v394 = vunpack.c.l.b16 %v138
    %v395 = vunpack.c.l.b16 %v139
    %v396 = vunpack.c.l.b16 %v140
    %v397 = vunpack.c.l.b16 %v141
    %v398 = vunpack.c.l.b16 %v142
    %v399 = vunpack.c.l.b16 %v143
    %v400 = vunpack.c.l.b16 %v144
    %v401 = vunpack.c.l.b16 %v145
    %v402 = vunpack.c.l.b16 %v146
    %v403 = vunpack.c.l.b16 %v147
    %v404 = vunpack.c.l.b16 %v148
    %v405 = vunpack.c.l.b16 %v149
    %v406 = vunpack.c.l.b16 %v150
    %v407 = vunpack.c.l.b16 %v151
    %v408 = vunpack.c.l.b16 %v152
    %v409 = vunpack.c.l.b16 %v153
    %v410 = vunpack.c.l.b16 %v154
    %v411 = vunpack.c.l.b16 %v155
    %v412 = vunpack.c.l.b16 %v156
    %v413 = vunpack.c.l.b16 %v157
    %v414 = vunpack.c.l.b16 %v158
    %v415 = vunpack.c.l.b16 %v159
    %v416 = vunpack.c.l.b16 %v160
    %v417 = vunpack.c.l.b16 %v161
    %v418 = vunpack.c.l.b16 %v162
    %v419 = vunpack.c.l.b16 %v163
    %v420 = vunpack.c.l.b16 %v164
    %v421 = vunpack.c.l.b16 %v165
    %v422 = vunpack.c.l.b16 %v166
    %v423 = vunpack.c.l.b16 %v167
    %v424 = vunpack.c.l.b16 %v168
    %v425 = vunpack.c.l.b16 %v169
    %v426 = vunpack.c.l.b16 %v170
    %v427 = vunpack.c.l.b16 %v171
    %v428 = vunpack.c.l.b16 %v172
    %v429 = vunpack.c.l.b16 %v173
    %v430 = vunpack.c.l.b16 %v174
    %v431 = vunpack.c.l.b16 %v175
    %v432 = vunpack.c.l.b16 %v176
    %v433 = vunpack.c.l.b16 %v177
    %v434 = vunpack.c.l.b16 %v178
    %v435 = vunpack.c.l.b16 %v179
    %v436 = vunpack.c.l.b16 %v180
    %v437 = vunpack.c.l.b16 %v181
    %v438 = vunpack.c.l.b16 %v182
    %v439 = vunpack.c.l.b16 %v183
    %v440 = vunpack.c.l.b16 %v184
    %v441 = vunpack.c.l.b16 %v185
    %v442 = vunpack.c.l.b16 %v186
    %v443 = vunpack.c.l.b16 %v187
    %v444 = vunpack.c.l.b16 %v188
    %v445 = vunpack.c.l.b16 %v189
    %v446 = vunpack.c.l.b16 %v190
    %v447 = vunpack.c.l.b16 %v191
    %v448 = vunpack.c.l.b16 %v192
    %v449 = vunpack.c.l.b16 %v193
    %v450 = vunpack.c.l.b16 %v194
    %v451 = vpack.c.b16 %v324, %v323
    %v452 = vpack.c.b16 %v326, %v325
    %v453 = vpack.c.b16 %v328, %v327
    %v454 = vpack.c.b16 %v330, %v329
    %v455 = vpack.c.b16 %v332, %v331
    %v456 = vpack.c.b16 %v334, %v333
    %v457 = vpack.c.b16 %v336, %v335
    %v458 = vpack.c.b16 %v338, %v337
    %v459 = vpack.c.b16 %v340, %v339
    %v460 = vpack.c.b16 %v342, %v341
    %v461 = vpack.c.b16 %v344, %v343
    %v462 = vpack.c.b16 %v346, %v345
    %v463 = vpack.c.b16 %v348, %v347
    %v464 = vpack.c.b16 %v350, %v349
    %v465 = vpack.c.b16 %v352, %v351
    %v466 = vpack.c.b16 %v354, %v353
    %v467 = vpack.c.b16 %v356, %v355
    %v468 = vpack.c.b16 %v358, %v357
    %v469 = vpack.c.b16 %v360, %v359
    %v470 = vpack.c.b16 %v362, %v361
    %v471 = vpack.c.b16 %v364, %v363
    %v472 = vpack.c.b16 %v366, %v365
    %v473 = vpack.c.b16 %v368, %v367
    %v474 = vpack.c.b16 %v370, %v369
    %v475 = vpack.c.b16 %v372, %v371
    %v476 = vpack.c.b16 %v374, %v373
    %v477 = vpack.c.b16 %v376, %v375
    %v478 = vpack.c.b16 %v378, %v377
    %v479 = vpack.c.b16 %v380, %v379
    %v480 = vpack.c.b16 %v382, %v381
    %v481 = vpack.c.b16 %v384, %v383
    %v482 = vpack.c.b16 %v386, %v385
    %v483 = vpack.c.b16 %v388, %v387
    %v484 = vpack.c.b16 %v390, %v389
    %v485 = vpack.c.b16 %v392, %v391
    %v486 = vpack.c.b16 %v394, %v393
    %v487 = vpack.c.b16 %v396, %v395
    %v488 = vpack.c.b16 %v398, %v397
    %v489 = vpack.c.b16 %v400, %v399
    %v490 = vpack.c.b16 %v402, %v401
    %v491 = vpack.c.b16 %v404, %v403
    %v492 = vpack.c.b16 %v406, %v405
    %v493 = vpack.c.b16 %v408, %v407
    %v494 = vpack.c.b16 %v410, %v409
    %v495 = vpack.c.b16 %v412, %v411
    %v496 = vpack.c.b16 %v414, %v413
    %v497 = vpack.c.b16 %v416, %v415
    %v498 = vpack.c.b16 %v418, %v417
    %v499 = vpack.c.b16 %v420, %v419
    %v500 = vpack.c.b16 %v422, %v421
    %v501 = vpack.c.b16 %v424, %v423
    %v502 = vpack.c.b16 %v426, %v425
    %v503 = vpack.c.b16 %v428, %v427
    %v504 = vpack.c.b16 %v430, %v429
    %v505 = vpack.c.b16 %v432, %v431
    %v506 = vpack.c.b16 %v434, %v433
    %v507 = vpack.c.b16 %v436, %v435
    %v508 = vpack.c.b16 %v438, %v437
    %v509 = vpack.c.b16 %v440, %v439
    %v510 = vpack.c.b16 %v442, %v441
    %v511 = vpack.c.b16 %v444, %v443
    %v512 = vpack.c.b16 %v446, %v445
    %v513 = vpack.c.b16 %v448, %v447
    %v514 = vpack.c.b16 %v450, %v449
    %579 = vmatpush.bf16.msra.mxu0 %v458
    %580 = vmatpush.bf16.msra.mxu0 %v457
    %581 = vmatpush.bf16.msra.mxu0 %v456
    %582 = vmatpush.bf16.msra.mxu0 %v455
    %583 = vmatpush.bf16.msra.mxu0 %v454
    %584 = vmatpush.bf16.msra.mxu0 %v453
    %585 = vmatpush.bf16.msra.mxu0 %v452
    %586 = vmatpush.bf16.msra.mxu0 %v451
    %587 = vmatmul.bf16.gmra.mxu0 %v59
    %v588 = vpop.f32.mrf.mxu0
    %v589 = vadd.f32 0.0, %v588
    %v590 = vpop.f32.mrf.mxu0
    %v591 = vadd.f32 0.0, %v590
    %592 = vdwg.mxu0
    %593 = vmatpush.bf16.msra.mxu0 %v466
    %594 = vmatpush.bf16.msra.mxu0 %v465
    %595 = vmatpush.bf16.msra.mxu0 %v464
    %596 = vmatpush.bf16.msra.mxu0 %v463
    %597 = vmatpush.bf16.msra.mxu0 %v462
    %598 = vmatpush.bf16.msra.mxu0 %v461
    %599 = vmatpush.bf16.msra.mxu0 %v460
    %600 = vmatpush.bf16.msra.mxu0 %v459
    %601 = vmatmul.bf16.gmra.mxu0 %v60
    %v602 = vpop.f32.mrf.mxu0
    %v603 = vadd.f32 %v589, %v602
    %v604 = vpop.f32.mrf.mxu0
    %v605 = vadd.f32 %v591, %v604
    %606 = vdwg.mxu0
    %607 = vmatpush.bf16.msra.mxu0 %v474
    %608 = vmatpush.bf16.msra.mxu0 %v473
    %609 = vmatpush.bf16.msra.mxu0 %v472
    %610 = vmatpush.bf16.msra.mxu0 %v471
    %611 = vmatpush.bf16.msra.mxu0 %v470
    %612 = vmatpush.bf16.msra.mxu0 %v469
    %613 = vmatpush.bf16.msra.mxu0 %v468
    %614 = vmatpush.bf16.msra.mxu0 %v467
    %615 = vmatmul.bf16.gmra.mxu0 %v61
    %v616 = vpop.f32.mrf.mxu0
    %v617 = vadd.f32 %v603, %v616
    %v618 = vpop.f32.mrf.mxu0
    %v619 = vadd.f32 %v605, %v618
    %620 = vdwg.mxu0
    %621 = vmatpush.bf16.msra.mxu0 %v482
    %622 = vmatpush.bf16.msra.mxu0 %v481
    %623 = vmatpush.bf16.msra.mxu0 %v480
    %624 = vmatpush.bf16.msra.mxu0 %v479
    %625 = vmatpush.bf16.msra.mxu0 %v478
    %626 = vmatpush.bf16.msra.mxu0 %v477
    %627 = vmatpush.bf16.msra.mxu0 %v476
    %628 = vmatpush.bf16.msra.mxu0 %v475
    %629 = vmatmul.bf16.gmra.mxu0 %v62
    %v630 = vpop.f32.mrf.mxu0
    %v631 = vadd.f32 %v617, %v630
    %v632 = vpop.f32.mrf.mxu0
    %v633 = vadd.f32 %v619, %v632
    %634 = vdwg.mxu0
    %635 = vmatpush.bf16.msra.mxu0 %v490
    %636 = vmatpush.bf16.msra.mxu0 %v489
    %637 = vmatpush.bf16.msra.mxu0 %v488
    %638 = vmatpush.bf16.msra.mxu0 %v487
    %639 = vmatpush.bf16.msra.mxu0 %v486
    %640 = vmatpush.bf16.msra.mxu0 %v485
    %641 = vmatpush.bf16.msra.mxu0 %v484
    %642 = vmatpush.bf16.msra.mxu0 %v483
    %643 = vmatmul.bf16.gmra.mxu0 %v63
    %v644 = vpop.f32.mrf.mxu0
    %v645 = vadd.f32 %v631, %v644
    %v646 = vpop.f32.mrf.mxu0
    %v647 = vadd.f32 %v633, %v646
    %648 = vdwg.mxu0
    %649 = vmatpush.bf16.msra.mxu0 %v498
    %650 = vmatpush.bf16.msra.mxu0 %v497
    %651 = vmatpush.bf16.msra.mxu0 %v496
    %652 = vmatpush.bf16.msra.mxu0 %v495
    %653 = vmatpush.bf16.msra.mxu0 %v494
    %654 = vmatpush.bf16.msra.mxu0 %v493
    %655 = vmatpush.bf16.msra.mxu0 %v492
    %656 = vmatpush.bf16.msra.mxu0 %v491
    %657 = vmatmul.bf16.gmra.mxu0 %v64
    %v658 = vpop.f32.mrf.mxu0
    %v659 = vadd.f32 %v645, %v658
    %v660 = vpop.f32.mrf.mxu0
    %v661 = vadd.f32 %v647, %v660
    %662 = vdwg.mxu0
    %663 = vmatpush.bf16.msra.mxu0 %v506
    %664 = vmatpush.bf16.msra.mxu0 %v505
    %665 = vmatpush.bf16.msra.mxu0 %v504
    %666 = vmatpush.bf16.msra.mxu0 %v503
    %667 = vmatpush.bf16.msra.mxu0 %v502
    %668 = vmatpush.bf16.msra.mxu0 %v501
    %669 = vmatpush.bf16.msra.mxu0 %v500
    %670 = vmatpush.bf16.msra.mxu0 %v499
    %671 = vmatmul.bf16.gmra.mxu0 %v65
    %v672 = vpop.f32.mrf.mxu0
    %v673 = vadd.f32 %v659, %v672
    %v674 = vpop.f32.mrf.mxu0
    %v675 = vadd.f32 %v661, %v674
    %676 = vdwg.mxu0
    %677 = vmatpush.bf16.msra.mxu0 %v514
    %678 = vmatpush.bf16.msra.mxu0 %v513
    %679 = vmatpush.bf16.msra.mxu0 %v512
    %680 = vmatpush.bf16.msra.mxu0 %v511
    %681 = vmatpush.bf16.msra.mxu0 %v510
    %682 = vmatpush.bf16.msra.mxu0 %v509
    %683 = vmatpush.bf16.msra.mxu0 %v508
    %684 = vmatpush.bf16.msra.mxu0 %v507
    %685 = vmatmul.bf16.gmra.mxu0 %v66
    %v686 = vpop.f32.mrf.mxu0
    %v687 = vadd.f32 %v673, %v686
    %v688 = vpop.f32.mrf.mxu0
    %v689 = vadd.f32 %v675, %v688
    %690 = vdwg.mxu0
    %v691 = vadd.f32 %v41, %v687
    %v692 = vadd.f32 %v42, %v689
    %693 = vst [vmem:[%s4] sm:$0xff] %v691
    %694 = vst [vmem:[%s4 + $0x8] sm:$0xff] %v692
    // Predicated region
    $region26: #{_forward_impl.1} parent=1 // pred_check
      %p695 = pneg %p35
    $region27: #{_forward_impl.1} parent=1 // pred_check_branch
      %697 = sbr.rel (%p695) target = $region29
    $region28: #{_forward_impl.1} parent=1 // pred_region
      %v698 = vld [vmem:[%s4] sm:$0xff]
      %v699 = vld [vmem:[%s4 + $0x8] sm:$0xff]
      %v700 = vld [vmem:[%s2] sm:$0x1]
      %v702 = vperm.slane %v700, 0
      %v704 = vadd.f32 %v698, %v702
      %v705 = vadd.f32 %v699, %v702
      %706 = vst [vmem:[%s4] sm:$0xff] %v704
      %707 = vst [vmem:[%s4 + $0x8] sm:$0xff] %v705
      %708 = vmax.xlane.f32.xlu0 %v704
      %v709 = vpop.xlane.xlu0 %708
      %710 = vmax.xlane.f32.xlu0 %v705
      %v711 = vpop.xlane.xlu0 %710
      %v712 = vsub.f32 %v704, %v709
      %v713 = vsub.f32 %v705, %v711
      %v714 = vmul.f32 %v712, 1.442695
      %v715 = vpow.pop %v714
      %v716 = vmul.f32 %v713, 1.442695
      %v717 = vpow.pop %v716
      %718 = vadd.xlane.f32.xlu0 %v715
      %v719 = vpop.xlane.xlu0 %718
      %720 = vadd.xlane.f32.xlu0 %v717
      %v721 = vpop.xlane.xlu0 %720
      %v722 = vlog2.pop %v719
      %v723 = vmul.f32 %v722, 0.6931472
      %v724 = vlog2.pop %v721
      %v725 = vmul.f32 %v724, 0.6931472
      %v726 = vadd.f32 %v723, %v709
      %v727 = vadd.f32 %v725, %v711
      %v728 = vld [vmem:[%s3] sm:$0xff]
      %v729 = vld [vmem:[%s3 + $0x8] sm:$0xff]
      %v730 = vlaneseq
      %v731 = vand.u32 %v730, 127
      %732 = vset.pattern.permute.xlu0 0
      %733 = vperm.xlu0 %732, %v728
      %v734 = vpop.permute.xlu0 %733
      %735 = vset.pattern.permute.xlu0 0
      %736 = vperm.xlu0 %735, %v729
      %v737 = vpop.permute.xlu0 %736
      %vm738 = vcmp.eq.s32.totalorder %v731, %v734
      %vm739 = vcmp.eq.s32.totalorder %v731, %v737
      %v740 = vsel %vm738, %v704, 0.0
      %v741 = vsel %vm739, %v705, 0.0
      %742 = vadd.xlane.f32.xlu0 %v740
      %v743 = vpop.xlane.xlu0 %742
      %744 = vadd.xlane.f32.xlu0 %v741
      %v745 = vpop.xlane.xlu0 %744
      %vm746 = vcmp.ge.s32.totalorder %v728, 0
      %vm747 = vcmp.ge.s32.totalorder %v729, 0
      %v748 = vsub.f32 %v726, %v743
      %v749 = vsub.f32 %v727, %v745
      %v750 = vsel %vm746, %v748, 0.0
      %v751 = vsel %vm747, %v749, 0.0
      %vm752 = vcmask 7168
      %753 = vst.msk [vmem:[%s5] sm:$0xff] %vm752, %v750
      %754 = vst.msk [vmem:[%s5 + $0x8] sm:$0xff] %vm752, %v751
    $region29: #{_forward_impl.1} parent=1 // pred_fallthru
      _
    // Predicated region
    $region30: #{_forward_impl.1} parent=1 // pred_check
      _
    $region31: #{_forward_impl.1} parent=1 // pred_check_branch
      %756 = sbr.rel (0) target = $region33
    $region32: #{_forward_impl.1} parent=1 // pred_region
      _
    $region33: #{_forward_impl.1} parent=1 // pred_fallthru
      _
    // Predicated region
    $region34: #{_forward_impl.1} parent=1 // pred_check
      _
    $region35: #{_forward_impl.1} parent=1 // pred_check_branch
      %758 = sbr.rel (0) target = $region37
    $region36: #{_forward_impl.1} parent=1 // pred_region
      _
    $region37: #{_forward_impl.1} parent=1 // pred_fallthru
      _
    // Predicated region
    $region38: #{_forward_impl.1} parent=1 // pred_check
      _
    $region39: #{_forward_impl.1} parent=1 // pred_check_branch
      %760 = sbr.rel (0) target = $region41
    $region40: #{_forward_impl.1} parent=1 // pred_region
      _
    $region41: #{_forward_impl.1} parent=1 // pred_fallthru
      _
    // Predicated region
    $region42: #{_forward_impl.1} parent=1 // pred_check
      _
    $region43: #{_forward_impl.1} parent=1 // pred_check_branch
      %762 = sbr.rel (0) target = $region45
    $region44: #{_forward_impl.1} parent=1 // pred_region
      _
    $region45: #{_forward_impl.1} parent=1 // pred_fallthru
      _
    %763 = vsyncpa [#allocation3], 1

</llo_original>
